<compile_context>
chip_gen: v5e
topology: v5e:2x2
jax: 0.10.0
libtpu: 0.0.40
codegen_flags: <defaults>
</compile_context>

<pallas_src>
import jax
import jax.numpy as jnp
from jax.experimental import pallas as pl
from jax.experimental.pallas import tpu as pltpu


def _round_up(v, m):
    return ((v + m - 1) // m) * m


def _csl_kernel(ctx_ref, x_ref, wl_ref, bl_ref, wgb_ref, bgb_ref, out_ref,
                gate_ref, bias_ref):
    # grid = (B, NT); batch is outer/"parallel", N-tiles inner/"arbitrary".
    n = pl.program_id(1)

    # Hyper path: one fused (1, Dc) @ (Dc, 2*Do) matmul, computed once per batch
    # on the first N tile, kept in VMEM scratch for all remaining tiles.
    @pl.when(n == 0)
    def _():
        c = ctx_ref[0]                                   # (1, Dc)
        gb = jnp.dot(c, wgb_ref[...],
                     preferred_element_type=jnp.float32) + bgb_ref[...]
        do = gate_ref.shape[-1]                          # lane-aligned split
        gate_ref[...] = jax.nn.sigmoid(gb[:, :do])
        bias_ref[...] = gb[:, do:]

    # Main path: (TN, Di) @ (Di, Do) + bl, then per-batch gate/bias FMA.
    h = jnp.dot(x_ref[0], wl_ref[...],
                preferred_element_type=jnp.float32) + bl_ref[...]
    out_ref[0] = (h * gate_ref[...] + bias_ref[...]).astype(out_ref.dtype)


def concat_squash_linear(ctx, x, params, *, tile_n=512):
    """ctx: (B, 1, dim_ctx), x: (B, N, dim_in) -> (B, N, dim_out)."""
    wl, bl, wg, bg, wb = (
        params["wl"], params["bl"], params["wg"], params["bg"], params["wb"]
    )
    B, N, Di = x.shape
    _, _, Dc = ctx.shape
    Do = wl.shape[1]

    # --- layout padding -----------------------------------------------------
    Do_p = _round_up(Do, 128)              # lane-dense output (unmasked vst)
    Di_p = _round_up(Di, 8)                # sublane-aligned contraction dims
    Dc_p = _round_up(Dc, 8)
    TN = min(_round_up(N, 8), tile_n)      # N tile: multiple of 8, capped
    N_p = _round_up(N, TN)
    NT = N_p // TN

    wdt = wl.dtype

    def pad2(a, rows, cols):
        return jnp.pad(a, ((0, rows - a.shape[0]), (0, cols - a.shape[1])))

    wl_p = pad2(wl, Di_p, Do_p)
    bl_p = pad2(bl, 1, Do_p)
    # Fused hyper weights: [Wg | Wb] along the output axis, each half padded to
    # Do_p (so the split inside the kernel is lane-aligned). Hyper bias has no
    # bias term, so its half of the fused bias is zero.
    wgb = jnp.concatenate([pad2(wg, Dc_p, Do_p), pad2(wb, Dc_p, Do_p)], axis=1)
    bgb = jnp.concatenate([pad2(bg, 1, Do_p), jnp.zeros((1, Do_p), wdt)], axis=1)

    x_p = jnp.pad(x, ((0, 0), (0, N_p - N), (0, Di_p - Di)))
    ctx_p = jnp.pad(ctx, ((0, 0), (0, 0), (0, Dc_p - Dc)))

    out_p = pl.pallas_call(
        _csl_kernel,
        out_shape=jax.ShapeDtypeStruct((B, N_p, Do_p), x.dtype),
        grid_spec=pltpu.PrefetchScalarGridSpec(
            num_scalar_prefetch=0,
            grid=(B, NT),
            in_specs=[
                pl.BlockSpec((1, 1, Dc_p), lambda b, n: (b, 0, 0)),    # ctx
                pl.BlockSpec((1, TN, Di_p), lambda b, n: (b, n, 0)),   # x tile
                pl.BlockSpec((Di_p, Do_p), lambda b, n: (0, 0)),       # Wl
                pl.BlockSpec((1, Do_p), lambda b, n: (0, 0)),          # bl
                pl.BlockSpec((Dc_p, 2 * Do_p), lambda b, n: (0, 0)),   # [Wg|Wb]
                pl.BlockSpec((1, 2 * Do_p), lambda b, n: (0, 0)),      # [bg|0]
            ],
            out_specs=pl.BlockSpec((1, TN, Do_p), lambda b, n: (b, n, 0)),
            scratch_shapes=[
                pltpu.VMEM((1, Do_p), jnp.float32),   # per-batch gate
                pltpu.VMEM((1, Do_p), jnp.float32),   # per-batch bias
            ],
        ),
        compiler_params=pltpu.CompilerParams(
            # N axis is "arbitrary": gate/bias scratch is carried across N tiles
            # of the same batch, so it must not be sharded across cores.
            dimension_semantics=("parallel", "arbitrary"),
        ),
    )(ctx_p, x_p, wl_p, bl_p, wgb, bgb)

    # Strip N padding and the lane-padding columns of dim_out.
    return out_p[:, :N, :Do]


def init_params(key, dim_in, dim_out, dim_ctx, dtype=jnp.float32):
    """Deterministic init mimicking nn.Linear defaults (uniform +/- 1/sqrt(fan_in))."""
    k = jax.random.split(key, 5)
    lim_l = 1.0 / jnp.sqrt(dim_in)
    lim_c = 1.0 / jnp.sqrt(dim_ctx)
    return {
        # stored pre-transposed: (in_features, out_features)
        "wl": jax.random.uniform(k[0], (dim_in, dim_out), dtype, -lim_l, lim_l),
        "bl": jax.random.uniform(k[1], (1, dim_out), dtype, -lim_l, lim_l),
        "wg": jax.random.uniform(k[2], (dim_ctx, dim_out), dtype, -lim_c, lim_c),
        "bg": jax.random.uniform(k[3], (1, dim_out), dtype, -lim_c, lim_c),
        "wb": jax.random.uniform(k[4], (dim_ctx, dim_out), dtype, -lim_c, lim_c),
    }


def reference(ctx, x, p):
    gate = jax.nn.sigmoid(jnp.einsum("bic,cd->bid", ctx, p["wg"]) + p["bg"][None])
    bias = jnp.einsum("bic,cd->bid", ctx, p["wb"])
    h = jnp.einsum("bni,id->bnd", x, p["wl"]) + p["bl"][None]
    return h * gate + bias


if __name__ == "__main__":
    B, N = 2, 8
    dim_in, dim_out, dim_ctx = 32, 64, 16

    key = jax.random.PRNGKey(0)
    kx, kc, kp = jax.random.split(key, 3)

    x = jax.random.normal(kx, (B, N, dim_in), jnp.float32)
    ctx = jax.random.normal(kc, (B, 1, dim_ctx), jnp.float32)
    params = init_params(kp, dim_in, dim_out, dim_ctx)

    out = concat_squash_linear(ctx, x, params)
    out = jax.block_until_ready(out)

    ref = reference(ctx, x, params)
    assert out.shape == (B, N, dim_out)
    assert jnp.allclose(out, ref, atol=1e-5, rtol=1e-5), "mismatch vs JAX reference"

    # A second, larger shape to exercise N tiling and padding paths.
    B2, N2 = 3, 700
    x2 = jax.random.normal(kx, (B2, N2, dim_in), jnp.float32)
    ctx2 = jax.random.normal(kc, (B2, 1, dim_ctx), jnp.float32)
    out2 = jax.block_until_ready(concat_squash_linear(ctx2, x2, params))
    ref2 = reference(ctx2, x2, params)
    assert out2.shape == (B2, N2, dim_out)
    assert jnp.allclose(out2, ref2, atol=1e-5, rtol=1e-5), "mismatch (tiled case)"

    print("KERNEL_OK")
</pallas_src>

<mosaic_0001>
module attributes {stable_mosaic.version = 11 : i64} {
  func.func @_csl_kernel(%arg0: i32, %arg1: i32, %arg2: memref<1x1x16xf32, #tpu.memory_space<vmem>>, %arg3: memref<1x8x32xf32, #tpu.memory_space<vmem>>, %arg4: memref<32x128xf32, #tpu.memory_space<vmem>>, %arg5: memref<1x128xf32, #tpu.memory_space<vmem>>, %arg6: memref<16x256xf32, #tpu.memory_space<vmem>>, %arg7: memref<1x256xf32, #tpu.memory_space<vmem>>, %arg8: memref<1x8x128xf32, #tpu.memory_space<vmem>>, %arg9: memref<1x128xf32, #tpu.memory_space<vmem>>, %arg10: memref<1x128xf32, #tpu.memory_space<vmem>>) attributes {dimension_semantics = [#tpu.dimension_semantics<parallel>, #tpu.dimension_semantics<arbitrary>], iteration_bounds = array<i64: 2, 1>, scalar_prefetch = 0 : i64, scratch_operands = 2 : i64, tpu.core_type = #tpu.core_type<tc>, window_params = [{transform_indices = @transform_0, window_bounds = array<i64: 1, 1, 16>}, {transform_indices = @transform_1, window_bounds = array<i64: 1, 8, 32>}, {pipeline_mode = #tpu.pipeline_mode<synchronous>, transform_indices = @transform_2, window_bounds = array<i64: 32, 128>}, {pipeline_mode = #tpu.pipeline_mode<synchronous>, transform_indices = @transform_3, window_bounds = array<i64: 1, 128>}, {pipeline_mode = #tpu.pipeline_mode<synchronous>, transform_indices = @transform_4, window_bounds = array<i64: 16, 256>}, {pipeline_mode = #tpu.pipeline_mode<synchronous>, transform_indices = @transform_5, window_bounds = array<i64: 1, 256>}, {transform_indices = @transform_6, window_bounds = array<i64: 1, 8, 128>}]} {
    %c0_i32 = arith.constant 0 : i32
    %0 = arith.cmpi eq, %arg1, %c0_i32 : i32
    %1 = arith.extui %0 : i1 to i32
    %c0_i32_0 = arith.constant 0 : i32
    %2 = arith.cmpi ne, %1, %c0_i32_0 : i32
    scf.if %2 {
      %c0_14 = arith.constant 0 : index
      %c0_15 = arith.constant 0 : index
      %c0_16 = arith.constant 0 : index
      %19 = vector.load %arg2[%c0_14, %c0_15, %c0_16] : memref<1x1x16xf32, #tpu.memory_space<vmem>>, vector<1x1x16xf32>
      %20 = vector.shape_cast %19 : vector<1x1x16xf32> to vector<1x16xf32>
      %c0_17 = arith.constant 0 : index
      %c0_18 = arith.constant 0 : index
      %21 = vector.load %arg6[%c0_17, %c0_18] : memref<16x256xf32, #tpu.memory_space<vmem>>, vector<16x256xf32>
      %cst_19 = arith.constant dense<0.000000e+00> : vector<1x256xf32>
      %22 = tpu.matmul %20, %21, %cst_19 {dimension_numbers = #tpu.dot_dimension_numbers<[1], [0], [0], [1], [0, 0, 1, 1], [], []>} : vector<1x16xf32>, vector<16x256xf32>, vector<1x256xf32> -> vector<1x256xf32>
      %c0_20 = arith.constant 0 : index
      %c0_21 = arith.constant 0 : index
      %23 = vector.load %arg7[%c0_20, %c0_21] : memref<1x256xf32, #tpu.memory_space<vmem>>, vector<1x256xf32>
      %24 = arith.addf %22, %23 : vector<1x256xf32>
      %25 = vector.extract_strided_slice %24 {offsets = [0, 0], sizes = [1, 128], strides = [1, 1]} : vector<1x256xf32> to vector<1x128xf32>
      %26 = arith.negf %25 : vector<1x128xf32>
      %27 = math.exp %26 : vector<1x128xf32>
      %cst_22 = arith.constant 1.000000e+00 : f32
      %28 = vector.broadcast %cst_22 : f32 to vector<1x128xf32>
      %29 = arith.addf %28, %27 : vector<1x128xf32>
      %30 = arith.divf %28, %29 : vector<1x128xf32>
      %c0_23 = arith.constant 0 : index
      %c0_24 = arith.constant 0 : index
      %31 = vector.load %arg9[%c0_23, %c0_24] : memref<1x128xf32, #tpu.memory_space<vmem>>, vector<1x128xf32>
      tpu.vector_store %arg9[%c0_23, %c0_24], %30 {strides = array<i32>} : memref<1x128xf32, #tpu.memory_space<vmem>>, vector<1x128xf32>,
      %32 = vector.extract_strided_slice %24 {offsets = [0, 128], sizes = [1, 128], strides = [1, 1]} : vector<1x256xf32> to vector<1x128xf32>
      %c0_25 = arith.constant 0 : index
      %c0_26 = arith.constant 0 : index
      %33 = vector.load %arg10[%c0_25, %c0_26] : memref<1x128xf32, #tpu.memory_space<vmem>>, vector<1x128xf32>
      tpu.vector_store %arg10[%c0_25, %c0_26], %32 {strides = array<i32>} : memref<1x128xf32, #tpu.memory_space<vmem>>, vector<1x128xf32>,
    } else {
    }
    %c0 = arith.constant 0 : index
    %c0_1 = arith.constant 0 : index
    %c0_2 = arith.constant 0 : index
    %3 = vector.load %arg3[%c0, %c0_1, %c0_2] : memref<1x8x32xf32, #tpu.memory_space<vmem>>, vector<1x8x32xf32>
    %4 = vector.shape_cast %3 : vector<1x8x32xf32> to vector<8x32xf32>
    %c0_3 = arith.constant 0 : index
    %c0_4 = arith.constant 0 : index
    %5 = vector.load %arg4[%c0_3, %c0_4] : memref<32x128xf32, #tpu.memory_space<vmem>>, vector<32x128xf32>
    %cst = arith.constant dense<0.000000e+00> : vector<8x128xf32>
    %6 = tpu.matmul %4, %5, %cst {dimension_numbers = #tpu.dot_dimension_numbers<[1], [0], [0], [1], [0, 0, 1, 1], [], []>} : vector<8x32xf32>, vector<32x128xf32>, vector<8x128xf32> -> vector<8x128xf32>
    %c0_5 = arith.constant 0 : index
    %c0_6 = arith.constant 0 : index
    %7 = vector.load %arg5[%c0_5, %c0_6] : memref<1x128xf32, #tpu.memory_space<vmem>>, vector<1x128xf32>
    %8 = vector.broadcast %7 : vector<1x128xf32> to vector<8x128xf32>
    %9 = arith.addf %6, %8 : vector<8x128xf32>
    %c0_7 = arith.constant 0 : index
    %c0_8 = arith.constant 0 : index
    %10 = vector.load %arg9[%c0_7, %c0_8] : memref<1x128xf32, #tpu.memory_space<vmem>>, vector<1x128xf32>
    %11 = vector.broadcast %10 : vector<1x128xf32> to vector<8x128xf32>
    %12 = arith.mulf %9, %11 : vector<8x128xf32>
    %c0_9 = arith.constant 0 : index
    %c0_10 = arith.constant 0 : index
    %13 = vector.load %arg10[%c0_9, %c0_10] : memref<1x128xf32, #tpu.memory_space<vmem>>, vector<1x128xf32>
    %14 = vector.broadcast %13 : vector<1x128xf32> to vector<8x128xf32>
    %15 = arith.addf %12, %14 : vector<8x128xf32>
    %c0_11 = arith.constant 0 : index
    %c0_12 = arith.constant 0 : index
    %c0_13 = arith.constant 0 : index
    %16 = vector.load %arg8[%c0_11, %c0_12, %c0_13] : memref<1x8x128xf32, #tpu.memory_space<vmem>>, vector<1x8x128xf32>
    %17 = vector.shape_cast %16 : vector<1x8x128xf32> to vector<8x128xf32>
    %18 = vector.shape_cast %15 : vector<8x128xf32> to vector<1x8x128xf32>
    tpu.vector_store %arg8[%c0_11, %c0_12, %c0_13], %18 {strides = array<i32>} : memref<1x8x128xf32, #tpu.memory_space<vmem>>, vector<1x8x128xf32>,
    return
  }
  func.func @transform_0(%arg0: i32, %arg1: i32) -> (i32, i32, i32) {
    %c0_i32 = arith.constant 0 : i32
    %c0_i32_0 = arith.constant 0 : i32
    %c0_i32_1 = arith.constant 0 : i32
    return %arg0, %c0_i32, %c0_i32_0 : i32, i32, i32
  }
  func.func @transform_1(%arg0: i32, %arg1: i32) -> (i32, i32, i32) {
    %c0_i32 = arith.constant 0 : i32
    %c0_i32_0 = arith.constant 0 : i32
    return %arg0, %arg1, %c0_i32 : i32, i32, i32
  }
  func.func @transform_2(%arg0: i32, %arg1: i32) -> (i32, i32) {
    %c0_i32 = arith.constant 0 : i32
    %c0_i32_0 = arith.constant 0 : i32
    %c0_i32_1 = arith.constant 0 : i32
    return %c0_i32, %c0_i32_0 : i32, i32
  }
  func.func @transform_3(%arg0: i32, %arg1: i32) -> (i32, i32) {
    %c0_i32 = arith.constant 0 : i32
    %c0_i32_0 = arith.constant 0 : i32
    %c0_i32_1 = arith.constant 0 : i32
    return %c0_i32, %c0_i32_0 : i32, i32
  }
  func.func @transform_4(%arg0: i32, %arg1: i32) -> (i32, i32) {
    %c0_i32 = arith.constant 0 : i32
    %c0_i32_0 = arith.constant 0 : i32
    %c0_i32_1 = arith.constant 0 : i32
    return %c0_i32, %c0_i32_0 : i32, i32
  }
  func.func @transform_5(%arg0: i32, %arg1: i32) -> (i32, i32) {
    %c0_i32 = arith.constant 0 : i32
    %c0_i32_0 = arith.constant 0 : i32
    %c0_i32_1 = arith.constant 0 : i32
    return %c0_i32, %c0_i32_0 : i32, i32
  }
  func.func @transform_6(%arg0: i32, %arg1: i32) -> (i32, i32, i32) {
    %c0_i32 = arith.constant 0 : i32
    %c0_i32_0 = arith.constant 0 : i32
    return %arg0, %arg1, %c0_i32 : i32, i32, i32
  }
}

</mosaic_0001>

<llo_original>
// kernel: tpu_custom_call.1
$region0: #{tpu_custom_call.1}
  #allocation0 [shape = 'u32[]', space=smem, size = 0x4, offset = 0x4, fixed_abs, tag = 'smem constant byte address 0x4 - core index']
  #allocation1 [shape = 'u32[72,128]{1,0:T(1,128)}', space=vmem, size = 0x9000, scoped, tag = 'internal scratch']
  #allocation2 [shape = 'f32[1,128]{1,0:T(1,128)}', space=vmem, size = 0x200, scoped, tag = 'scratch operand']
  #allocation3 [shape = 'f32[1,128]{1,0:T(1,128)}', space=vmem, size = 0x200, scoped, tag = 'scratch operand']
  %s0 = inlined_call_operand.hbm [shape: f32[2,1,16], index: 0, kind: input, shape index: {}]
  %s1 = inlined_call_operand.hbm [shape: f32[2,8,32], index: 1, kind: input, shape index: {}]
  %s2 = inlined_call_operand.hbm [shape: f32[32,128], index: 2, kind: input, shape index: {}]
  %s3 = inlined_call_operand.vmem [shape: f32[1,128], index: 3, kind: input, shape index: {}]
  %s4 = inlined_call_operand.hbm [shape: f32[16,256], index: 4, kind: input, shape index: {}]
  %s5 = inlined_call_operand.vmem [shape: f32[1,256], index: 5, kind: input, shape index: {}]
  %s6 = inlined_call_operand.hbm [shape: f32[2,8,128], index: 6, kind: output, shape index: {}]
  %s7 = sld [smem:[#allocation0]]
  $region77: #{tpu_custom_call.1} parent=0
    _
  %s9 = ssub.s32 1, %s7
  %s10 = scalar_select 0, %s9, %s7
  $region1: #{tpu_custom_call.1} parent=0
    #allocation4 [shape = 'u8[1024]{0}', space=vmem, size = 0x400, scoped, tag = 'input window, operand 0']
    #allocation5 [shape = 's32[2]{0}', space=sflag, size = 0x8, scoped, tag = 'scoped memory for tpu_custom_call.1']
    #allocation6 [shape = 's32[2]{0}', space=sflag, size = 0x8, scoped, tag = 'scoped memory for tpu_custom_call.1']
    #allocation7 [shape = 'u8[8192]{0}', space=vmem, size = 0x2000, scoped, tag = 'input window, operand 1']
    #allocation8 [shape = 's32[2]{0}', space=sflag, size = 0x8, scoped, tag = 'scoped memory for tpu_custom_call.1']
    #allocation9 [shape = 'u8[16384]{0}', space=vmem, size = 0x4000, scoped, tag = 'input window, operand 2, single buffered']
    #allocation10 [shape = 'u8[16384]{0}', space=vmem, size = 0x4000, scoped, tag = 'input window, operand 4, single buffered']
    #allocation11 [shape = 's32[1]{0}', space=sflag, size = 0x4, scoped, tag = 'scoped memory for tpu_custom_call.1']
    #allocation12 [shape = 'u8[8192]{0}', space=vmem, size = 0x2000, scoped, tag = 'output window, operand 0']
    %11 = vsyncpa [#allocation5], 0
    %s12 = scalar_lea.sflag [#allocation5], 1
    %13 = vsyncpa %s12, 0
    %14 = vsyncpa [#allocation8], 0
    %s15 = scalar_lea.sflag [#allocation8], 1
    %16 = vsyncpa %s15, 0
    %17 = vsyncpa [#allocation11], 0
    %18 = vsyncpa [#allocation6], 0
    %s19 = scalar_lea.sflag [#allocation6], 1
    %20 = vsyncpa %s19, 0
    loop: start=0, step=1, limit=4
    $region2: #{tpu_custom_call.1} parent=1 // loop_pre_header
      _
    $region3: #{tpu_custom_call.1} parent=1 // loop_header
      %s22 = sphi 0, %s26
      %p23 = scmp.ge.s32.totalorder %s22, 4
      %s29 = sphi 0, %s41
      %s30 = sphi 0, %s37
      %s31 = sphi 0, %s29
      %s32 = sphi 0, %s30
      %s33 = sphi 0, %s31
      %s34 = sphi 0, %s32
      %s44 = sphi 0, %s46
      %s47 = sphi 0, %s44
      %s48 = sphi 0, %s47
      %s64 = sphi 0, %s48
      %s72 = sphi 0, %s74
      %s75 = sphi 0, %s72
      %s76 = sphi 0, %s75
      %s92 = sphi 0, %s76
      %s96 = sphi 0, %s96
      %s98 = sphi 0, %s96
      %s99 = sphi 0, %s98
      %s113 = sphi 0, %s99
      %s117 = sphi 0, %s117
      %s119 = sphi 0, %s117
      %s120 = sphi 0, %s119
      %s134 = sphi 0, %s120
      %s138 = sphi 0, %s138
      %s140 = sphi 0, %s138
      %s141 = sphi 0, %s140
      %s155 = sphi 0, %s141
      %s159 = sphi 0, %s159
      %s161 = sphi 0, %s159
      %s162 = sphi 0, %s161
      %s176 = sphi 0, %s162
      %s184 = sphi 0, %s186
      %s187 = sphi 0, %s184
      %s188 = sphi 0, %s187
      %s204 = sphi 0, %s188
    $region4: #{tpu_custom_call.1} parent=1 // loop_header_branch
      %25 = sbr.rel (%p23) target = $region8
    $region5: #{tpu_custom_call.1} parent=1 // loop_body
      %s27 = ssub.s32 %s22, 1
      %s28 = ssub.s32 %s22, 2
      %s35 = sadd.s32 1, %s30
      %p36 = scmp.ge.s32.totalorder %s35, 1
      %s37 = scalar_select %p36, 0, %s35
      %s38 = sadd.s32 1, %s29
      %s39 = scalar_select %p36, %s38, %s29
      %p40 = scmp.ge.s32.totalorder %s39, 2
      %s41 = scalar_select %p40, 0, %s39
      %s42 = ssub.s32 %s29, %s41
      %p43 = scmp.eq.s32.totalorder %s42, 0
      %s45 = sadd.s32 %s44, 1
      %s46 = scalar_select %p43, %s44, %s45
      %p49 = pneg %p43
      %p50 = scmp.eq.s32.totalorder %s22, 1
      %p51 = por %p49, %p50
      %p52 = scmp.ne.s32.totalorder %s44, %s47
      %p53 = scmp.eq.s32.totalorder %s22, 0
      %p54 = por %p52, %p53
      %p55 = scmp.ne.s32.totalorder %s44, %s47
      %p56 = scmp.eq.s32.totalorder %s27, 1
      %p57 = por %p55, %p56
      %p58 = scmp.ne.s32.totalorder %s47, %s48
      %p59 = scmp.eq.s32.totalorder %s27, 0
      %p60 = por %p58, %p59
      %p61 = scmp.ne.s32.totalorder %s47, %s48
      %p62 = scmp.eq.s32.totalorder %s28, 1
      %p63 = por %p61, %p62
      %p65 = scmp.ne.s32.totalorder %s48, %s64
      %p66 = scmp.eq.s32.totalorder %s28, 0
      %p67 = por %p65, %p66
      %s68 = ssub.s32 %s29, %s41
      %s69 = ssub.s32 %s30, %s37
      %s70 = sor.u32 %s68, %s69
      %p71 = scmp.eq.s32.totalorder %s70, 0
      %s73 = sadd.s32 %s72, 1
      %s74 = scalar_select %p71, %s72, %s73
      %p77 = pneg %p71
      %p78 = scmp.eq.s32.totalorder %s22, 1
      %p79 = por %p77, %p78
      %p80 = scmp.ne.s32.totalorder %s72, %s75
      %p81 = scmp.eq.s32.totalorder %s22, 0
      %p82 = por %p80, %p81
      %p83 = scmp.ne.s32.totalorder %s72, %s75
      %p84 = scmp.eq.s32.totalorder %s27, 1
      %p85 = por %p83, %p84
      %p86 = scmp.ne.s32.totalorder %s75, %s76
      %p87 = scmp.eq.s32.totalorder %s27, 0
      %p88 = por %p86, %p87
      %p89 = scmp.ne.s32.totalorder %s75, %s76
      %p90 = scmp.eq.s32.totalorder %s28, 1
      %p91 = por %p89, %p90
      %p93 = scmp.ne.s32.totalorder %s76, %s92
      %p94 = scmp.eq.s32.totalorder %s28, 0
      %p95 = por %p93, %p94
      %s97 = sadd.s32 %s96, 1
      %p100 = scmp.eq.s32.totalorder %s22, 1
      %p101 = scmp.ne.s32.totalorder %s96, %s98
      %p102 = scmp.eq.s32.totalorder %s22, 0
      %p103 = por %p101, %p102
      %p104 = scmp.ne.s32.totalorder %s96, %s98
      %p105 = scmp.eq.s32.totalorder %s27, 1
      %p106 = por %p104, %p105
      %p107 = scmp.ne.s32.totalorder %s98, %s99
      %p108 = scmp.eq.s32.totalorder %s27, 0
      %p109 = por %p107, %p108
      %p110 = scmp.ne.s32.totalorder %s98, %s99
      %p111 = scmp.eq.s32.totalorder %s28, 1
      %p112 = por %p110, %p111
      %p114 = scmp.ne.s32.totalorder %s99, %s113
      %p115 = scmp.eq.s32.totalorder %s28, 0
      %p116 = por %p114, %p115
      %s118 = sadd.s32 %s117, 1
      %p121 = scmp.eq.s32.totalorder %s22, 1
      %p122 = scmp.ne.s32.totalorder %s117, %s119
      %p123 = scmp.eq.s32.totalorder %s22, 0
      %p124 = por %p122, %p123
      %p125 = scmp.ne.s32.totalorder %s117, %s119
      %p126 = scmp.eq.s32.totalorder %s27, 1
      %p127 = por %p125, %p126
      %p128 = scmp.ne.s32.totalorder %s119, %s120
      %p129 = scmp.eq.s32.totalorder %s27, 0
      %p130 = por %p128, %p129
      %p131 = scmp.ne.s32.totalorder %s119, %s120
      %p132 = scmp.eq.s32.totalorder %s28, 1
      %p133 = por %p131, %p132
      %p135 = scmp.ne.s32.totalorder %s120, %s134
      %p136 = scmp.eq.s32.totalorder %s28, 0
      %p137 = por %p135, %p136
      %s139 = sadd.s32 %s138, 1
      %p142 = scmp.eq.s32.totalorder %s22, 1
      %p143 = scmp.ne.s32.totalorder %s138, %s140
      %p144 = scmp.eq.s32.totalorder %s22, 0
      %p145 = por %p143, %p144
      %p146 = scmp.ne.s32.totalorder %s138, %s140
      %p147 = scmp.eq.s32.totalorder %s27, 1
      %p148 = por %p146, %p147
      %p149 = scmp.ne.s32.totalorder %s140, %s141
      %p150 = scmp.eq.s32.totalorder %s27, 0
      %p151 = por %p149, %p150
      %p152 = scmp.ne.s32.totalorder %s140, %s141
      %p153 = scmp.eq.s32.totalorder %s28, 1
      %p154 = por %p152, %p153
      %p156 = scmp.ne.s32.totalorder %s141, %s155
      %p157 = scmp.eq.s32.totalorder %s28, 0
      %p158 = por %p156, %p157
      %s160 = sadd.s32 %s159, 1
      %p163 = scmp.eq.s32.totalorder %s22, 1
      %p164 = scmp.ne.s32.totalorder %s159, %s161
      %p165 = scmp.eq.s32.totalorder %s22, 0
      %p166 = por %p164, %p165
      %p167 = scmp.ne.s32.totalorder %s159, %s161
      %p168 = scmp.eq.s32.totalorder %s27, 1
      %p169 = por %p167, %p168
      %p170 = scmp.ne.s32.totalorder %s161, %s162
      %p171 = scmp.eq.s32.totalorder %s27, 0
      %p172 = por %p170, %p171
      %p173 = scmp.ne.s32.totalorder %s161, %s162
      %p174 = scmp.eq.s32.totalorder %s28, 1
      %p175 = por %p173, %p174
      %p177 = scmp.ne.s32.totalorder %s162, %s176
      %p178 = scmp.eq.s32.totalorder %s28, 0
      %p179 = por %p177, %p178
      %s180 = ssub.s32 %s29, %s41
      %s181 = ssub.s32 %s30, %s37
      %s182 = sor.u32 %s180, %s181
      %p183 = scmp.eq.s32.totalorder %s182, 0
      %s185 = sadd.s32 %s184, 1
      %s186 = scalar_select %p183, %s184, %s185
      %p189 = pneg %p183
      %p190 = scmp.eq.s32.totalorder %s22, 1
      %p191 = por %p189, %p190
      %p192 = scmp.ne.s32.totalorder %s184, %s187
      %p193 = scmp.eq.s32.totalorder %s22, 0
      %p194 = por %p192, %p193
      %p195 = scmp.ne.s32.totalorder %s184, %s187
      %p196 = scmp.eq.s32.totalorder %s27, 1
      %p197 = por %p195, %p196
      %p198 = scmp.ne.s32.totalorder %s187, %s188
      %p199 = scmp.eq.s32.totalorder %s27, 0
      %p200 = por %p198, %p199
      %p201 = scmp.ne.s32.totalorder %s187, %s188
      %p202 = scmp.eq.s32.totalorder %s28, 1
      %p203 = por %p201, %p202
      %p205 = scmp.ne.s32.totalorder %s188, %s204
      %p206 = scmp.eq.s32.totalorder %s28, 0
      %p207 = por %p205, %p206
      %p208 = scmp.le.s32.totalorder 1, %s22
      %p209 = scmp.lt.s32.totalorder %s22, 3
      %p210 = pnand %p208, %p209
      %p211 = pneg %p210
      // Predicated region
      $region9: #{tpu_custom_call.1} parent=5 // pred_check
        _
      $region10: #{tpu_custom_call.1} parent=5 // pred_check_branch
        %213 = sbr.rel (%p210) target = $region12
      $region11: #{tpu_custom_call.1} parent=5 // pred_region
        %s214 = ssub.s32 %s22, 1
        // Predicated region
        $region13: #{tpu_custom_call.1} parent=11 // pred_check
          %p215 = pneg %p109
        $region14: #{tpu_custom_call.1} parent=11 // pred_check_branch
          %217 = sbr.rel (%p215) target = $region16
        $region15: #{tpu_custom_call.1} parent=11 // pred_region
          %219 = vsyncadd [#allocation8], 0
          %s220 = sshll.u32 %s2, 4
          %s221 = int_to_ptr.hbm [resolvable:$true] %s220
          %s222 = sshll.u32 [#allocation9], 4
          %s223 = int_to_ptr.vmem [resolvable:$true] %s222
          %228 = dma.hbm_to_vmem [thread:$0]  %s221, 512, %s223, [#allocation8], 128, 128, 8
        $region16: #{tpu_custom_call.1} parent=11 // pred_fallthru
          _
        // Predicated region
        $region17: #{tpu_custom_call.1} parent=11 // pred_check
          %p229 = pneg %p130
        $region18: #{tpu_custom_call.1} parent=11 // pred_check_branch
          %231 = sbr.rel (%p229) target = $region20
        $region19: #{tpu_custom_call.1} parent=11 // pred_region
          _
        $region20: #{tpu_custom_call.1} parent=11 // pred_fallthru
          _
        // Predicated region
        $region21: #{tpu_custom_call.1} parent=11 // pred_check
          %p232 = pneg %p151
        $region22: #{tpu_custom_call.1} parent=11 // pred_check_branch
          %234 = sbr.rel (%p232) target = $region24
        $region23: #{tpu_custom_call.1} parent=11 // pred_region
          %236 = vsyncadd [#allocation11], 0
          %s237 = sshll.u32 %s4, 4
          %s238 = int_to_ptr.hbm [resolvable:$true] %s237
          %s239 = sshll.u32 [#allocation10], 4
          %s240 = int_to_ptr.vmem [resolvable:$true] %s239
          %245 = dma.hbm_to_vmem [thread:$0]  %s238, 512, %s240, [#allocation11], 256, 256, 16
        $region24: #{tpu_custom_call.1} parent=11 // pred_fallthru
          _
        // Predicated region
        $region25: #{tpu_custom_call.1} parent=11 // pred_check
          %p246 = pneg %p172
        $region26: #{tpu_custom_call.1} parent=11 // pred_check_branch
          %248 = sbr.rel (%p246) target = $region28
        $region27: #{tpu_custom_call.1} parent=11 // pred_region
          _
        $region28: #{tpu_custom_call.1} parent=11 // pred_fallthru
          _
      $region12: #{tpu_custom_call.1} parent=5 // pred_fallthru
        _
      %p249 = scmp.lt.s32.totalorder %s22, 2
      // Predicated region
      $region29: #{tpu_custom_call.1} parent=5 // pred_check
        %p250 = pneg %p249
      $region30: #{tpu_custom_call.1} parent=5 // pred_check_branch
        %252 = sbr.rel (%p250) target = $region32
      $region31: #{tpu_custom_call.1} parent=5 // pred_region
        // Predicated region
        $region33: #{tpu_custom_call.1} parent=31 // pred_check
          %p253 = pneg %p54
        $region34: #{tpu_custom_call.1} parent=31 // pred_check_branch
          %255 = sbr.rel (%p253) target = $region36
        $region35: #{tpu_custom_call.1} parent=31 // pred_region
          %s256 = sand.u32 %s44, 1
          %s257 = scalar_lea.sflag [#allocation5], %s256
          %s258 = sand.u32 %s44, 1
          %s259 = scalar_lea.vmem [#allocation4], %s258
          %261 = vsyncadd %s257, 0
          %s262 = scalar_lea.hbm %s0, %s29
          %s264 = sshll.u32 %s262, 4
          %s265 = int_to_ptr.hbm [resolvable:$true] %s264
          %s266 = sshll.u32 %s259, 4
          %s267 = int_to_ptr.vmem [resolvable:$true] %s266
          %269 = dma.hbm_to_vmem [thread:$0]  %s265, 16, %s267, %s257
        $region36: #{tpu_custom_call.1} parent=31 // pred_fallthru
          _
        // Predicated region
        $region37: #{tpu_custom_call.1} parent=31 // pred_check
          %p270 = pneg %p82
        $region38: #{tpu_custom_call.1} parent=31 // pred_check_branch
          %272 = sbr.rel (%p270) target = $region40
        $region39: #{tpu_custom_call.1} parent=31 // pred_region
          %s273 = sand.u32 %s22, 1
          %s274 = scalar_lea.sflag [#allocation8], %s273
          %s275 = sand.u32 %s72, 1
          %s276 = smul.addr %s275, 8
          %s277 = scalar_lea.vmem [#allocation7], %s276
          %279 = vsyncadd %s274, 0
          %s280 = sadd.s32 %s30, %s29
          %s281 = smul.addr %s280, 8
          %s282 = scalar_lea.hbm %s1, %s281
          %s284 = sshll.u32 %s282, 4
          %s285 = int_to_ptr.hbm [resolvable:$true] %s284
          %s286 = sshll.u32 %s277, 4
          %s287 = int_to_ptr.vmem [resolvable:$true] %s286
          %289 = dma.hbm_to_vmem [thread:$0]  %s285, 128, %s287, %s274
        $region40: #{tpu_custom_call.1} parent=31 // pred_fallthru
          _
      $region32: #{tpu_custom_call.1} parent=5 // pred_fallthru
        _
      %p290 = scmp.le.s32.totalorder 1, %s22
      %p291 = scmp.lt.s32.totalorder %s22, 3
      %p292 = pnand %p290, %p291
      %p293 = pneg %p292
      // Predicated region
      $region41: #{tpu_custom_call.1} parent=5 // pred_check
        _
      $region42: #{tpu_custom_call.1} parent=5 // pred_check_branch
        %295 = sbr.rel (%p292) target = $region44
      $region43: #{tpu_custom_call.1} parent=5 // pred_region
        %s296 = ssub.s32 %s22, 1
        %s297 = sand.u32 %s47, 1
        %s298 = scalar_lea.sflag [#allocation5], %s297
        %s299 = sand.u32 %s47, 1
        %s300 = scalar_lea.vmem [#allocation4], %s299
        // Predicated region
        $region45: #{tpu_custom_call.1} parent=43 // pred_check
          %p301 = pneg %p60
        $region46: #{tpu_custom_call.1} parent=43 // pred_check_branch
          %303 = sbr.rel (%p301) target = $region48
        $region47: #{tpu_custom_call.1} parent=43 // pred_region
          %305 = dma.done %s298, 16
        $region48: #{tpu_custom_call.1} parent=43 // pred_fallthru
          _
        %s306 = sand.u32 %s27, 1
        %s307 = scalar_lea.sflag [#allocation8], %s306
        %s308 = sand.u32 %s75, 1
        %s309 = smul.addr %s308, 8
        %s310 = scalar_lea.vmem [#allocation7], %s309
        // Predicated region
        $region49: #{tpu_custom_call.1} parent=43 // pred_check
          %p311 = pneg %p88
        $region50: #{tpu_custom_call.1} parent=43 // pred_check_branch
          %313 = sbr.rel (%p311) target = $region52
        $region51: #{tpu_custom_call.1} parent=43 // pred_region
          %315 = dma.done %s307, 128
        $region52: #{tpu_custom_call.1} parent=43 // pred_fallthru
          _
        // Predicated region
        $region53: #{tpu_custom_call.1} parent=43 // pred_check
          %p316 = pneg %p109
        $region54: #{tpu_custom_call.1} parent=43 // pred_check_branch
          %318 = sbr.rel (%p316) target = $region56
        $region55: #{tpu_custom_call.1} parent=43 // pred_region
          %320 = dma.done [#allocation8], 512
        $region56: #{tpu_custom_call.1} parent=43 // pred_fallthru
          _
        // Predicated region
        $region57: #{tpu_custom_call.1} parent=43 // pred_check
          %p321 = pneg %p151
        $region58: #{tpu_custom_call.1} parent=43 // pred_check_branch
          %323 = sbr.rel (%p321) target = $region60
        $region59: #{tpu_custom_call.1} parent=43 // pred_region
          %325 = dma.done [#allocation11], 512
        $region60: #{tpu_custom_call.1} parent=43 // pred_fallthru
          _
        %s326 = sand.u32 %s47, 1
        %s327 = scalar_lea.sflag [#allocation5], %s326
        %s328 = sand.u32 %s47, 1
        %s329 = scalar_lea.vmem [#allocation4], %s328
        %p330 = pneg %p60
        %p331 = pneg %p57
        %s332 = sand.u32 %s27, 1
        %s333 = scalar_lea.sflag [#allocation8], %s332
        %s334 = sand.u32 %s75, 1
        %s335 = smul.addr %s334, 8
        %s336 = scalar_lea.vmem [#allocation7], %s335
        %p337 = pneg %p88
        %p338 = pneg %p85
        %p339 = pneg %p109
        %p340 = pneg %p106
        %p341 = pneg %p130
        %p342 = pneg %p127
        %p343 = pneg %p151
        %p344 = pneg %p148
        %p345 = pneg %p172
        %p346 = pneg %p169
        %p347 = pneg %p200
        %p348 = pneg %p197
        %s349 = sand.u32 %s187, 1
        %s350 = scalar_lea.sflag [#allocation6], %s349
        %s351 = sand.u32 %s187, 1
        %s352 = smul.addr %s351, 8
        %s353 = scalar_lea.vmem [#allocation12], %s352
        %p354 = scmp.eq.s32.totalorder %s32, 0
        // Predicated region
        $region61: #{tpu_custom_call.1} parent=43 // pred_check
          %p355 = pneg %p354
        $region62: #{tpu_custom_call.1} parent=43 // pred_check_branch
          %357 = sbr.rel (%p355) target = $region64
        $region63: #{tpu_custom_call.1} parent=43 // pred_region
          %v358 = vld [vmem:[%s300] sm:$0x1]
          %v359 = vld [vmem:[#allocation10] sm:$0xff]
          %v360 = vld [vmem:[#allocation10 + $0x8] sm:$0xff]
          %v361 = vld [vmem:[#allocation10 + $0x10] sm:$0xff]
          %v362 = vld [vmem:[#allocation10 + $0x18] sm:$0xff]
          %v363 = vld [vmem:[%s5] sm:$0x3]
          %v365 = vperm.slane %v363, 0
          %v366 = vperm.slane %v363, 1
          %vm369 = vcmask 130048
          %v371 = vsel %vm369, %v358, 0
          %373 = vmatpush.msra.mxu0 0.0
          %374 = vmatpush.msra.mxu0 0.0
          %375 = vmatpush.msra.mxu0 0.0
          %376 = vmatpush.msra.mxu0 0.0
          %377 = vmatpush.msra.mxu0 0.0
          %378 = vmatpush.msra.mxu0 0.0
          %379 = vmatpush.msra.mxu0 0.0
          %380 = vmatpush.msra.mxu0 0.0
          %381 = vmatpush.msra.mxu0 0.0
          %382 = vmatpush.msra.mxu0 0.0
          %383 = vmatpush.msra.mxu0 0.0
          %384 = vmatpush.msra.mxu0 0.0
          %385 = vmatpush.msra.mxu0 0.0
          %386 = vmatpush.msra.mxu0 0.0
          %387 = vmatpush.msra.mxu0 %v361
          %388 = vmatpush.msra.mxu0 %v359
          %389 = vmatmul.f32.gmra.mxu0 %v371
          %v390 = vpop.f32.mrf.mxu0
          %v391 = vadd.f32 %v365, %v390
          %392 = vdwg.mxu0
          %393 = vmatpush.msra.mxu0 0.0
          %394 = vmatpush.msra.mxu0 0.0
          %395 = vmatpush.msra.mxu0 0.0
          %396 = vmatpush.msra.mxu0 0.0
          %397 = vmatpush.msra.mxu0 0.0
          %398 = vmatpush.msra.mxu0 0.0
          %399 = vmatpush.msra.mxu0 0.0
          %400 = vmatpush.msra.mxu0 0.0
          %401 = vmatpush.msra.mxu0 0.0
          %402 = vmatpush.msra.mxu0 0.0
          %403 = vmatpush.msra.mxu0 0.0
          %404 = vmatpush.msra.mxu0 0.0
          %405 = vmatpush.msra.mxu0 0.0
          %406 = vmatpush.msra.mxu0 0.0
          %407 = vmatpush.msra.mxu0 %v362
          %408 = vmatpush.msra.mxu0 %v360
          %409 = vmatmul.f32.gmra.mxu0 %v371
          %v410 = vpop.f32.mrf.mxu0
          %v411 = vadd.f32 %v366, %v410
          %412 = vdwg.mxu0
          %v413 = vxor.u32 %v391, 2147483648
          %v414 = vmul.f32 %v413, 1.442695
          %v415 = vpow.pop %v414
          %v416 = vadd.f32 %v415, 1.0
          %v417 = vrcp.pop %v416
          %v418 = vmul.f32 %v416, %v417
          %v419 = vsub.f32 1.0, %v418
          %v420 = vmul.f32 %v417, %v419
          %v421 = vadd.f32 %v417, %v420
          %vm422 = vweird.f32 %v416
          %vm423 = vweird.f32 %v417
          %vm424 = vmor %vm422, %vm423
          %v425 = vsel %vm424, %v417, %v421
          %v426 = vand.u32 2147483647, %v416
          %vm427 = vcmp.eq.f32.partialorder %v426, 8.507059e+37
          %v428 = vand.u32 %v416, 2147483648
          %v429 = vor.u32 1.1754944e-38, %v428
          %v430 = vsel %vm427, %v429, %v425
          %v431 = vmul.f32 1.0, %v430
          %432 = vst [vmem:[#allocation2] sm:$0x1] %v431
          %433 = vst [vmem:[#allocation3] sm:$0x1] %v411
        $region64: #{tpu_custom_call.1} parent=43 // pred_fallthru
          _
        %v434 = vld [vmem:[%s310] sm:$0xff]
        %v435 = vld [vmem:[#allocation9] sm:$0xff]
        %v436 = vld [vmem:[#allocation9 + $0x8] sm:$0xff]
        %v437 = vld [vmem:[#allocation9 + $0x10] sm:$0xff]
        %v438 = vld [vmem:[#allocation9 + $0x18] sm:$0xff]
        %v439 = vld [vmem:[%s3] sm:$0x1]
        %v441 = vperm.slane %v439, 0
        %vm443 = vcmask 261120
        %v445 = vsel %vm443, %v434, 0
        %447 = vmatpush.msra.mxu0 0.0
        %448 = vmatpush.msra.mxu0 0.0
        %449 = vmatpush.msra.mxu0 0.0
        %450 = vmatpush.msra.mxu0 0.0
        %451 = vmatpush.msra.mxu0 0.0
        %452 = vmatpush.msra.mxu0 0.0
        %453 = vmatpush.msra.mxu0 0.0
        %454 = vmatpush.msra.mxu0 0.0
        %455 = vmatpush.msra.mxu0 0.0
        %456 = vmatpush.msra.mxu0 0.0
        %457 = vmatpush.msra.mxu0 0.0
        %458 = vmatpush.msra.mxu0 0.0
        %459 = vmatpush.msra.mxu0 %v438
        %460 = vmatpush.msra.mxu0 %v437
        %461 = vmatpush.msra.mxu0 %v436
        %462 = vmatpush.msra.mxu0 %v435
        %463 = vmatmul.f32.gmra.mxu0 %v445
        %v464 = vpop.f32.mrf.mxu0
        %v465 = vadd.f32 %v441, %v464
        %466 = vdwg.mxu0
        %v467 = vld [vmem:[#allocation2] sm:$0x1]
        %v469 = vperm.slane %v467, 0
        %v471 = vmul.f32 %v465, %v469
        %v472 = vld [vmem:[#allocation3] sm:$0x1]
        %v474 = vperm.slane %v472, 0
        %v476 = vadd.f32 %v471, %v474
        %477 = vst [vmem:[%s353] sm:$0xff] %v476
        %s478 = sand.u32 %s187, 1
        %s479 = scalar_lea.sflag [#allocation6], %s478
        %s480 = sand.u32 %s187, 1
        %s481 = smul.addr %s480, 8
        %s482 = scalar_lea.vmem [#allocation12], %s481
        // Predicated region
        $region65: #{tpu_custom_call.1} parent=43 // pred_check
          %p483 = pneg %p197
        $region66: #{tpu_custom_call.1} parent=43 // pred_check_branch
          %485 = sbr.rel (%p483) target = $region68
        $region67: #{tpu_custom_call.1} parent=43 // pred_region
          %487 = vsyncadd %s479, 0
          %s488 = sadd.s32 %s32, %s31
          %s489 = smul.addr %s488, 8
          %s490 = scalar_lea.hbm %s6, %s489
          %s492 = sshll.u32 %s482, 4
          %s493 = int_to_ptr.vmem [resolvable:$true] %s492
          %s494 = sshll.u32 %s490, 4
          %s495 = int_to_ptr.hbm [resolvable:$true] %s494
          %497 = dma.vmem_to_hbm [thread:$0]  %s493, 128, %s495, %s479
        $region68: #{tpu_custom_call.1} parent=43 // pred_fallthru
          _
      $region44: #{tpu_custom_call.1} parent=5 // pred_fallthru
        _
      %p498 = scmp.le.s32.totalorder 2, %s22
      // Predicated region
      $region69: #{tpu_custom_call.1} parent=5 // pred_check
        %p499 = pneg %p498
      $region70: #{tpu_custom_call.1} parent=5 // pred_check_branch
        %501 = sbr.rel (%p499) target = $region72
      $region71: #{tpu_custom_call.1} parent=5 // pred_region
        %s502 = ssub.s32 %s22, 2
        // Predicated region
        $region73: #{tpu_custom_call.1} parent=71 // pred_check
          %p503 = pneg %p203
        $region74: #{tpu_custom_call.1} parent=71 // pred_check_branch
          %505 = sbr.rel (%p503) target = $region76
        $region75: #{tpu_custom_call.1} parent=71 // pred_region
          %s506 = sand.u32 %s188, 1
          %s507 = scalar_lea.sflag [#allocation6], %s506
          %s508 = sand.u32 %s188, 1
          %s509 = smul.addr %s508, 8
          %s510 = scalar_lea.vmem [#allocation12], %s509
          %512 = dma.done %s507, 128
        $region76: #{tpu_custom_call.1} parent=71 // pred_fallthru
          _
      $region72: #{tpu_custom_call.1} parent=5 // pred_fallthru
        _
    $region6: #{tpu_custom_call.1} parent=1 // loop_footer
      %s26 = sadd.s32 1, %s22
    $region7: #{tpu_custom_call.1} parent=1 // loop_footer_branch
      %21 = sbr.rel target = $region3
    $region8: #{tpu_custom_call.1} parent=1 // loop_exit
      _
    %513 = vsyncpa [#allocation5], 1
    %s514 = scalar_lea.sflag [#allocation5], 1
    %515 = vsyncpa %s514, 1
    %516 = vsyncpa [#allocation8], 1
    %s517 = scalar_lea.sflag [#allocation8], 1
    %518 = vsyncpa %s517, 1
    %519 = vsyncpa [#allocation11], 1
    %520 = vsyncpa [#allocation6], 1
    %s521 = scalar_lea.sflag [#allocation6], 1
    %522 = vsyncpa %s521, 1

</llo_original>
